<compile_context>
chip_gen: v7x
topology: tpu7x:2x2x1
jax: 0.10.0
libtpu: 0.0.40
codegen_flags: <defaults>
</compile_context>

<pallas_src>
import math

import numpy as np
import jax
import jax.numpy as jnp
from jax.experimental import pallas as pl
from jax.experimental.pallas import tpu as pltpu


_SQRT_2_OVER_PI = math.sqrt(2.0 / math.pi)


def _gelu(x):
    # TODO(synk): PyTorch nn.GELU() defaults to the exact erf form; the tanh approximation
    # (max abs deviation ~1e-3) is used because it maps cleanly onto the TPU EUP.
    return 0.5 * x * (1.0 + jnp.tanh(_SQRT_2_OVER_PI * (x + 0.044715 * x * x * x)))


def _round_up(x, m):
    return (x + m - 1) // m * m


def _pick_row_tile(Ho, Wop, target_rows=256):
    """Largest TH dividing Ho with TH*Wop <= target_rows (keeps the im2col tile and the
    f32 result tile small -> no vreg spills), and TH <= Ho//2 whenever Ho >= 2 so the
    parallel grid has >= 2 row tiles even at batch 1 (v7x shards parallel axes over 2 TCs)."""
    cap = max(1, Ho // 2)
    best = 1
    for th in range(1, cap + 1):
        if Ho % th == 0 and th * Wop <= target_rows:
            best = th
    return best


def _pad_last2_bytes(s2, s1, nbytes):
    """VMEM footprint of a (s2, s1) tile: sublane padded (8 for f32, 16 for bf16),
    lane padded to 128."""
    sub = 8 * (4 // nbytes)
    return _round_up(max(s2, 1), sub) * _round_up(s1, 128) * nbytes


def _vmem_limit_bytes(resident_bytes):
    """Explicit scoped-VMEM budget: resident working set + headroom, never above the chip's
    physical VMEM (64 MiB/core on v7x, 128 MiB on v5e/v6e)."""
    try:
        cap = int(pltpu.get_tpu_info().vmem_capacity_bytes)
    except Exception:
        cap = 64 << 20                       # conservative: v7x per-core VMEM
    want = int(resident_bytes) + (8 << 20)
    return min(max(32 << 20, want), cap - (2 << 20))


# ------------------------------------------------------------------------- kernels

def _matmul_epilogue_kernel(x_ref, w_ref, b_ref, sc_ref, sh_ref, o_ref):
    """Plain (rows, K) x (K, Cout) matmul + bias + GELU + folded BatchNorm epilogue."""
    z = jnp.dot(x_ref[...], w_ref[...], preferred_element_type=jnp.float32)
    z = _gelu(z + b_ref[...])
    z = z * sc_ref[...] + sh_ref[...]
    o_ref[...] = z.astype(o_ref.dtype)


def _make_conv_kernel(stride, TH, Wop, Cin, Cout):
    """Conv3x3(stride) + bias + GELU + BatchNorm(eval) for one (TH, Wop) output row tile.

    The 3x3 window is gathered from stride^2 resident phase slabs (hoisted column slices),
    concatenated on the lane axis into a (TH*Wop, 9*Cin) im2col tile and pushed through the
    MXU as a single K = 9*Cin matmul (no per-tap accumulator read-modify-write)."""
    s = stride
    extra = 2 // s                # row halo beyond TH: 2 for stride 1, 1 for stride 2
    nph = s * s

    def kernel(*refs):
        x_refs = refs[:nph]                                   # per-batch phase slabs
        w_ref, b_ref, sc_ref, sh_ref, o_ref = refs[nph:]
        t = pl.program_id(1)
        row0 = pl.multiple_of(t * TH, TH)                     # aligned dynamic row start

        # Hoist column-offset slices: one (TH+extra, Wop, Cin) window per distinct
        # (phase, column-offset) pair (3 for stride 1, 6 for stride 2) instead of 9.
        col_win = {}
        for ky in range(3):
            for kx in range(3):
                key = ((ky % s) * s + (kx % s), kx // s)      # (phase index, column offset)
                if key not in col_win:
                    ph, c_off = key
                    col_win[key] = x_refs[ph][pl.ds(row0, TH + extra),
                                              pl.ds(c_off, Wop), :]

        # Assemble the im2col tile in (ky, kx) row-major order to match w.reshape(9*Cin, Cout).
        pieces = []
        for ky in range(3):
            for kx in range(3):
                key = ((ky % s) * s + (kx % s), kx // s)
                r_off = ky // s
                win = col_win[key][r_off:r_off + TH]          # leading-dim slice: no relayout
                pieces.append(win.reshape(TH * Wop, Cin))     # free merge: Wop % 8 == 0
        xcol = jnp.concatenate(pieces, axis=-1)               # (TH*Wop, 9*Cin)

        z = jnp.dot(xcol, w_ref[...], preferred_element_type=jnp.float32)
        z = _gelu(z + b_ref[...])                             # conv bias + GELU (f32)
        z = z * sc_ref[...] + sh_ref[...]                     # folded eval-mode BatchNorm
        o_ref[...] = z.astype(o_ref.dtype)

    return kernel


# ------------------------------------------------------------------------- wrappers

def conv3x3_gelu_bn(x_nhwc, w, bias, bn_scale, bn_shift, stride, *, io_dtype=jnp.bfloat16):
    """One Conv2d(3x3, stride, pad=1) + GELU + BatchNorm(eval) block as a Pallas kernel.

    x_nhwc: (B, H, W, Cin);  w: (3, 3, Cin, Cout) HWIO;  returns (B, Ho, Wo, Cout)."""
    B, Hin, Win, Cin = x_nhwc.shape
    Cout = w.shape[-1]
    s = int(stride)
    Ho = (Hin + 2 - 3) // s + 1
    Wo = (Win + 2 - 3) // s + 1
    Wop = _round_up(Wo, 8)              # lane/sublane-friendly output width; cropped after
    extra = 2 // s
    TH = _pick_row_tile(Ho, Wop)
    n_t = Ho // TH
    nbytes = jnp.dtype(io_dtype).itemsize

    x = x_nhwc.astype(io_dtype)
    w_flat = w.reshape(9 * Cin, Cout).astype(io_dtype)        # (ky, kx, ci) row-major
    b2 = bias.reshape(1, Cout).astype(jnp.float32)
    sc2 = bn_scale.reshape(1, Cout).astype(jnp.float32)
    sh2 = bn_shift.reshape(1, Cout).astype(jnp.float32)

    # VMEM residency estimate (double-buffered operands + in-kernel temporaries).
    w_bytes = _pad_last2_bytes(9 * Cin, Cout, nbytes)
    vec_bytes = 3 * _pad_last2_bytes(1, Cout, 4)
    out_bytes = _pad_last2_bytes(TH * Wop, Cout, nbytes)
    tmp_bytes = (_pad_last2_bytes(TH * Wop, 9 * Cin, nbytes)
                 + _pad_last2_bytes(TH * Wop, Cout, 4))

    vec_specs = [pl.BlockSpec((1, Cout), lambda b, t: (0, 0))] * 3
    out_spec = pl.BlockSpec((None, TH * Wop, Cout), lambda b, t: (b, t, 0))
    out_shape = jax.ShapeDtypeStruct((B, Ho * Wop, Cout), io_dtype)

    if Cin <= 8:
        # Tiny-Cin stem: a VMEM ref with trailing dim 3/4 would be lane-padded ~32-42x, so
        # build the 9*Cin im2col in the wrapper (9x HBM read of a tiny tensor) and run a
        # plain lane-dense matmul kernel with K = 9*Cin.
        pad_b = max(0, s * (Ho - 1) + 3 - (Hin + 2))
        pad_r = max(0, s * (Wop - 1) + 3 - (Win + 2))
        xp = jnp.pad(x, ((0, 0), (1, 1 + pad_b), (1, 1 + pad_r), (0, 0)))
        taps = [xp[:, ky:ky + s * (Ho - 1) + 1:s, kx:kx + s * (Wop - 1) + 1:s, :]
                for ky in range(3) for kx in range(3)]
        cols = jnp.concatenate(taps, axis=-1).reshape(B, Ho * Wop, 9 * Cin)

        col_bytes = _pad_last2_bytes(TH * Wop, 9 * Cin, nbytes)
        resident = 2 * (col_bytes + w_bytes + vec_bytes + out_bytes) + tmp_bytes

        out = pl.pallas_call(
            _matmul_epilogue_kernel,
            out_shape=out_shape,
            grid_spec=pltpu.PrefetchScalarGridSpec(
                num_scalar_prefetch=0,
                grid=(B, n_t),
                in_specs=[pl.BlockSpec((None, TH * Wop, 9 * Cin), lambda b, t: (b, t, 0)),
                          pl.BlockSpec((9 * Cin, Cout), lambda b, t: (0, 0))] + vec_specs,
                out_specs=out_spec),
            compiler_params=pltpu.CompilerParams(
                dimension_semantics=("parallel", "parallel"),
                vmem_limit_bytes=_vmem_limit_bytes(resident)),
        )(cols, w_flat, b2, sc2, sh2)
    else:
        # General path: phase-decomposed input stays resident per batch (1x HBM read, no
        # HBM im2col); every in-kernel tap is a contiguous slice of a phase slab.
        Hph, Wph = Ho + extra, Wop + extra
        pad_b = max(0, s * Hph - (Hin + 2))
        pad_r = max(0, s * Wph - (Win + 2))
        xp = jnp.pad(x, ((0, 0), (1, 1 + pad_b), (1, 1 + pad_r), (0, 0)))
        phases = [xp[:, pr::s, pc::s, :][:, :Hph, :Wph, :]
                  for pr in range(s) for pc in range(s)]

        phase_bytes = (s * s) * Hph * _pad_last2_bytes(Wph, Cin, nbytes)
        resident = 2 * (phase_bytes + w_bytes + vec_bytes + out_bytes) + tmp_bytes
        # TODO(synk): for very large images whose per-batch phase slabs overflow the scoped
        # VMEM budget (64 MiB on v7x), row-tile the input with a halo or use
        # pipeline_mode=pl.Buffered(1) on the phase specs instead of full residency.

        phase_spec = pl.BlockSpec((None, Hph, Wph, Cin), lambda b, t: (b, 0, 0, 0))
        out = pl.pallas_call(
            _make_conv_kernel(s, TH, Wop, Cin, Cout),
            out_shape=out_shape,
            grid_spec=pltpu.PrefetchScalarGridSpec(
                num_scalar_prefetch=0,
                grid=(B, n_t),
                in_specs=[phase_spec] * (s * s)
                         + [pl.BlockSpec((9 * Cin, Cout), lambda b, t: (0, 0))] + vec_specs,
                out_specs=out_spec),
            compiler_params=pltpu.CompilerParams(
                dimension_semantics=("parallel", "parallel"),
                vmem_limit_bytes=_vmem_limit_bytes(resident)),
        )(*phases, w_flat, b2, sc2, sh2)

    out = out.reshape(B, Ho, Wop, Cout)
    if Wop != Wo:
        out = out[:, :, :Wo, :]
    return out


def patch_embed_forward(x_nchw, params, io_dtype=jnp.bfloat16, output_layout="NCHW"):
    """Pallas forward of PatchEmbed: (B, Cin, H, W) -> (B, Cout, H//4, W//4)."""
    # TODO(synk): fusing each stride-2 conv with the following stride-1 conv into one
    # pallas_call (mid-channel intermediate kept in VMEM scratch with a 1-row halo) would
    # remove the lane-sparse Cout//2 HBM round trip between layers (largest win on v5e);
    # kept as separate per-layer kernels here.
    y = jnp.transpose(x_nchw, (0, 2, 3, 1))            # NCHW -> NHWC once (channels on lanes)
    for p in params:
        y = conv3x3_gelu_bn(y, p["w"], p["bias"], p["bn_scale"], p["bn_shift"],
                            p["stride"], io_dtype=io_dtype)
    if output_layout == "NHWC":
        return y
    # TODO(synk): this final transpose is a full extra HBM round trip and NCHW is
    # lane-hostile for downstream Pallas; consumers that accept NHWC should pass
    # output_layout="NHWC".
    return jnp.transpose(y, (0, 3, 1, 2))


# ----------------------------------------------------------------- pure-JAX reference

def patch_embed_reference(x_nchw, params, io_dtype=jnp.bfloat16):
    y = jnp.transpose(x_nchw, (0, 2, 3, 1))
    for p in params:
        xc = y.astype(io_dtype)
        wc = p["w"].astype(io_dtype)
        z = jax.lax.conv_general_dilated(
            xc, wc,
            window_strides=(p["stride"], p["stride"]),
            padding=((1, 1), (1, 1)),
            dimension_numbers=("NHWC", "HWIO", "NHWC"),
            preferred_element_type=jnp.float32)
        z = z + p["bias"][None, None, None, :]
        z = _gelu(z)
        z = z * p["bn_scale"][None, None, None, :] + p["bn_shift"][None, None, None, :]
        y = z.astype(io_dtype)
    return jnp.transpose(y, (0, 3, 1, 2))


# ------------------------------------------------------------------------ parameters

def init_patch_embed_params(key, in_channels, out_channels):
    # TODO(synk): BatchNorm2d is implemented in inference (eval) mode: running statistics
    # are folded into a per-channel scale/shift applied after GELU; training-mode batch
    # statistics are not computed in-kernel.
    mid = out_channels // 2
    cfg = [(in_channels, mid, 2), (mid, mid, 1),
           (mid, out_channels, 2), (out_channels, out_channels, 1)]
    eps = 1e-5
    params = []
    for cin, cout, stride in cfg:
        key, k1, k2, k3, k4, k5, k6 = jax.random.split(key, 7)
        w = jax.random.normal(k1, (3, 3, cin, cout), jnp.float32) / math.sqrt(9.0 * cin)
        b = 0.05 * jax.random.normal(k2, (cout,), jnp.float32)
        gamma = 1.0 + 0.1 * jax.random.normal(k3, (cout,), jnp.float32)
        beta = 0.1 * jax.random.normal(k4, (cout,), jnp.float32)
        mean = 0.1 * jax.random.normal(k5, (cout,), jnp.float32)
        var = jax.random.uniform(k6, (cout,), jnp.float32, minval=0.5, maxval=1.5)
        scale = gamma / jnp.sqrt(var + eps)
        shift = beta - mean * scale
        params.append(dict(w=w, bias=b, bn_scale=scale, bn_shift=shift, stride=stride))
    return params


if __name__ == "__main__":
    key = jax.random.PRNGKey(0)
    kx, kp = jax.random.split(key)
    B, Cin, H, W = 2, 4, 16, 16
    Cout = 32
    x = jax.random.normal(kx, (B, Cin, H, W), dtype=jnp.float32)
    params = init_patch_embed_params(kp, Cin, Cout)

    out = patch_embed_forward(x, params, io_dtype=jnp.bfloat16)
    out = jax.block_until_ready(out)
    assert out.shape == (B, Cout, H // 4, W // 4), out.shape

    ref = patch_embed_reference(x, params, io_dtype=jnp.bfloat16)
    ref = jax.block_until_ready(ref)

    np.testing.assert_allclose(np.asarray(out, dtype=np.float32),
                               np.asarray(ref, dtype=np.float32),
                               rtol=2e-2, atol=2e-2)
    print("KERNEL_OK")
</pallas_src>

<mosaic_0001>
module attributes {stable_mosaic.version = 11 : i64} {
  func.func @_matmul_epilogue_kernel(%arg0: i32, %arg1: i32, %arg2: memref<1x32x36xbf16, #tpu.memory_space<vmem>>, %arg3: memref<36x16xbf16, #tpu.memory_space<vmem>>, %arg4: memref<1x16xf32, #tpu.memory_space<vmem>>, %arg5: memref<1x16xf32, #tpu.memory_space<vmem>>, %arg6: memref<1x16xf32, #tpu.memory_space<vmem>>, %arg7: memref<1x32x16xbf16, #tpu.memory_space<vmem>>) attributes {dimension_semantics = [#tpu.dimension_semantics<parallel>, #tpu.dimension_semantics<parallel>], iteration_bounds = array<i64: 2, 2>, scalar_prefetch = 0 : i64, scratch_operands = 0 : i64, tpu.core_type = #tpu.core_type<tc>, window_params = [{transform_indices = @transform_0, window_bounds = array<i64: 1, 32, 36>}, {pipeline_mode = #tpu.pipeline_mode<synchronous>, transform_indices = @transform_1, window_bounds = array<i64: 36, 16>}, {pipeline_mode = #tpu.pipeline_mode<synchronous>, transform_indices = @transform_2, window_bounds = array<i64: 1, 16>}, {pipeline_mode = #tpu.pipeline_mode<synchronous>, transform_indices = @transform_3, window_bounds = array<i64: 1, 16>}, {pipeline_mode = #tpu.pipeline_mode<synchronous>, transform_indices = @transform_4, window_bounds = array<i64: 1, 16>}, {transform_indices = @transform_5, window_bounds = array<i64: 1, 32, 16>}]} {
    %c0 = arith.constant 0 : index
    %c0_0 = arith.constant 0 : index
    %c0_1 = arith.constant 0 : index
    %0 = vector.load %arg2[%c0, %c0_0, %c0_1] : memref<1x32x36xbf16, #tpu.memory_space<vmem>>, vector<1x32x36xbf16>
    %1 = vector.shape_cast %0 : vector<1x32x36xbf16> to vector<32x36xbf16>
    %c0_2 = arith.constant 0 : index
    %c0_3 = arith.constant 0 : index
    %2 = vector.load %arg3[%c0_2, %c0_3] : memref<36x16xbf16, #tpu.memory_space<vmem>>, vector<36x16xbf16>
    %cst = arith.constant dense<0.000000e+00> : vector<32x16xf32>
    %3 = tpu.matmul %1, %2, %cst {dimension_numbers = #tpu.dot_dimension_numbers<[1], [0], [0], [1], [0, 0, 1, 1], [], []>} : vector<32x36xbf16>, vector<36x16xbf16>, vector<32x16xf32> -> vector<32x16xf32>
    %c0_4 = arith.constant 0 : index
    %c0_5 = arith.constant 0 : index
    %4 = vector.load %arg4[%c0_4, %c0_5] : memref<1x16xf32, #tpu.memory_space<vmem>>, vector<1x16xf32>
    %5 = vector.broadcast %4 : vector<1x16xf32> to vector<32x16xf32>
    %6 = arith.addf %3, %5 : vector<32x16xf32>
    %cst_6 = arith.constant 5.000000e-01 : f32
    %7 = vector.broadcast %cst_6 : f32 to vector<32x16xf32>
    %8 = arith.mulf %7, %6 : vector<32x16xf32>
    %cst_7 = arith.constant 4.471500e-02 : f32
    %9 = vector.broadcast %cst_7 : f32 to vector<32x16xf32>
    %10 = arith.mulf %9, %6 : vector<32x16xf32>
    %11 = arith.mulf %10, %6 : vector<32x16xf32>
    %12 = arith.mulf %11, %6 : vector<32x16xf32>
    %13 = arith.addf %6, %12 : vector<32x16xf32>
    %cst_8 = arith.constant 0.797884583 : f32
    %14 = vector.broadcast %cst_8 : f32 to vector<32x16xf32>
    %15 = arith.mulf %14, %13 : vector<32x16xf32>
    %16 = math.tanh %15 : vector<32x16xf32>
    %cst_9 = arith.constant 1.000000e+00 : f32
    %17 = vector.broadcast %cst_9 : f32 to vector<32x16xf32>
    %18 = arith.addf %17, %16 : vector<32x16xf32>
    %19 = arith.mulf %8, %18 : vector<32x16xf32>
    %c0_10 = arith.constant 0 : index
    %c0_11 = arith.constant 0 : index
    %20 = vector.load %arg5[%c0_10, %c0_11] : memref<1x16xf32, #tpu.memory_space<vmem>>, vector<1x16xf32>
    %21 = vector.broadcast %20 : vector<1x16xf32> to vector<32x16xf32>
    %22 = arith.mulf %19, %21 : vector<32x16xf32>
    %c0_12 = arith.constant 0 : index
    %c0_13 = arith.constant 0 : index
    %23 = vector.load %arg6[%c0_12, %c0_13] : memref<1x16xf32, #tpu.memory_space<vmem>>, vector<1x16xf32>
    %24 = vector.broadcast %23 : vector<1x16xf32> to vector<32x16xf32>
    %25 = arith.addf %22, %24 : vector<32x16xf32>
    %26 = arith.truncf %25 : vector<32x16xf32> to vector<32x16xbf16>
    %c0_14 = arith.constant 0 : index
    %c0_15 = arith.constant 0 : index
    %c0_16 = arith.constant 0 : index
    %27 = vector.load %arg7[%c0_14, %c0_15, %c0_16] : memref<1x32x16xbf16, #tpu.memory_space<vmem>>, vector<1x32x16xbf16>
    %28 = vector.shape_cast %27 : vector<1x32x16xbf16> to vector<32x16xbf16>
    %29 = vector.shape_cast %26 : vector<32x16xbf16> to vector<1x32x16xbf16>
    tpu.vector_store %arg7[%c0_14, %c0_15, %c0_16], %29 {strides = array<i32>} : memref<1x32x16xbf16, #tpu.memory_space<vmem>>, vector<1x32x16xbf16>,
    return
  }
  func.func @transform_0(%arg0: i32, %arg1: i32) -> (i32, i32, i32) {
    %c0_i32 = arith.constant 0 : i32
    %c0_i32_0 = arith.constant 0 : i32
    return %arg0, %arg1, %c0_i32 : i32, i32, i32
  }
  func.func @transform_1(%arg0: i32, %arg1: i32) -> (i32, i32) {
    %c0_i32 = arith.constant 0 : i32
    %c0_i32_0 = arith.constant 0 : i32
    %c0_i32_1 = arith.constant 0 : i32
    return %c0_i32, %c0_i32_0 : i32, i32
  }
  func.func @transform_2(%arg0: i32, %arg1: i32) -> (i32, i32) {
    %c0_i32 = arith.constant 0 : i32
    %c0_i32_0 = arith.constant 0 : i32
    %c0_i32_1 = arith.constant 0 : i32
    return %c0_i32, %c0_i32_0 : i32, i32
  }
  func.func @transform_3(%arg0: i32, %arg1: i32) -> (i32, i32) {
    %c0_i32 = arith.constant 0 : i32
    %c0_i32_0 = arith.constant 0 : i32
    %c0_i32_1 = arith.constant 0 : i32
    return %c0_i32, %c0_i32_0 : i32, i32
  }
  func.func @transform_4(%arg0: i32, %arg1: i32) -> (i32, i32) {
    %c0_i32 = arith.constant 0 : i32
    %c0_i32_0 = arith.constant 0 : i32
    %c0_i32_1 = arith.constant 0 : i32
    return %c0_i32, %c0_i32_0 : i32, i32
  }
  func.func @transform_5(%arg0: i32, %arg1: i32) -> (i32, i32, i32) {
    %c0_i32 = arith.constant 0 : i32
    %c0_i32_0 = arith.constant 0 : i32
    return %arg0, %arg1, %c0_i32 : i32, i32, i32
  }
}

</mosaic_0001>

<llo_original>
// kernel: tpu_custom_call.1
$region0: #{tpu_custom_call.1}
  #allocation0 [shape = 'u32[]', space=smem, size = 0x4, offset = 0x4, fixed_abs, tag = 'smem constant byte address 0x4 - core index']
  #allocation1 [shape = 'u32[144,128]{1,0:T(1,128)}', space=vmem, size = 0x12000, scoped, tag = 'internal scratch']
  %s0 = inlined_call_operand.vmem [shape: bf16[2,64,36], index: 0, kind: input, shape index: {}]
  %s1 = inlined_call_operand.vmem [shape: bf16[36,16], index: 1, kind: input, shape index: {}]
  %s2 = inlined_call_operand.vmem [shape: f32[1,16], index: 2, kind: input, shape index: {}]
  %s3 = inlined_call_operand.vmem [shape: f32[1,16], index: 3, kind: input, shape index: {}]
  %s4 = inlined_call_operand.vmem [shape: f32[1,16], index: 4, kind: input, shape index: {}]
  %s5 = inlined_call_operand.vmem [shape: bf16[2,64,16], index: 5, kind: output, shape index: {}]
  %s6 = sld [smem:[#allocation0]]
  $region53: #{tpu_custom_call.1} parent=0
    _
  %s8 = ssub.s32 1, %s6
  %s9 = scalar_select 0, %s8, %s6
  loop: start=0, step=1, limit=6
  $region2: #{tpu_custom_call.1} parent=0 // loop_pre_header
    _
  $region3: #{tpu_custom_call.1} parent=0 // loop_header
    %s11 = sphi 0, %s15
    %p12 = scmp.ge.s32.totalorder %s11, 6
    %s18 = sphi 0, %s30
    %s19 = sphi 0, %s26
    %s20 = sphi 0, %s18
    %s21 = sphi 0, %s19
    %s22 = sphi 0, %s20
    %s23 = sphi 0, %s21
    %s35 = sphi 0, %s37
    %s38 = sphi 0, %s35
    %s39 = sphi 0, %s38
    %s55 = sphi 0, %s39
    %s59 = sphi 0, %s59
    %s61 = sphi 0, %s59
    %s62 = sphi 0, %s61
    %s76 = sphi 0, %s62
    %s80 = sphi 0, %s80
    %s82 = sphi 0, %s80
    %s83 = sphi 0, %s82
    %s97 = sphi 0, %s83
    %s101 = sphi 0, %s101
    %s103 = sphi 0, %s101
    %s104 = sphi 0, %s103
    %s118 = sphi 0, %s104
    %s122 = sphi 0, %s122
    %s124 = sphi 0, %s122
    %s125 = sphi 0, %s124
    %s139 = sphi 0, %s125
    %s147 = sphi 0, %s149
    %s150 = sphi 0, %s147
    %s151 = sphi 0, %s150
    %s167 = sphi 0, %s151
  $region4: #{tpu_custom_call.1} parent=0 // loop_header_branch
    %14 = sbr.rel (%p12) target = $region8
  $region5: #{tpu_custom_call.1} parent=0 // loop_body
    %s16 = ssub.s32 %s11, 1
    %s17 = ssub.s32 %s11, 2
    %s24 = sadd.s32 1, %s19
    %p25 = scmp.ge.s32.totalorder %s24, 2
    %s26 = scalar_select %p25, 0, %s24
    %s27 = sadd.s32 1, %s18
    %s28 = scalar_select %p25, %s27, %s18
    %p29 = scmp.ge.s32.totalorder %s28, 2
    %s30 = scalar_select %p29, 0, %s28
    %s31 = ssub.s32 %s18, %s30
    %s32 = ssub.s32 %s19, %s26
    %s33 = sor.u32 %s31, %s32
    %p34 = scmp.eq.s32.totalorder %s33, 0
    %s36 = sadd.s32 %s35, 1
    %s37 = scalar_select %p34, %s35, %s36
    %p40 = pneg %p34
    %p41 = scmp.eq.s32.totalorder %s11, 3
    %p42 = por %p40, %p41
    %p43 = scmp.ne.s32.totalorder %s35, %s38
    %p44 = scmp.eq.s32.totalorder %s11, 0
    %p45 = por %p43, %p44
    %p46 = scmp.ne.s32.totalorder %s35, %s38
    %p47 = scmp.eq.s32.totalorder %s16, 3
    %p48 = por %p46, %p47
    %p49 = scmp.ne.s32.totalorder %s38, %s39
    %p50 = scmp.eq.s32.totalorder %s16, 0
    %p51 = por %p49, %p50
    %p52 = scmp.ne.s32.totalorder %s38, %s39
    %p53 = scmp.eq.s32.totalorder %s17, 3
    %p54 = por %p52, %p53
    %p56 = scmp.ne.s32.totalorder %s39, %s55
    %p57 = scmp.eq.s32.totalorder %s17, 0
    %p58 = por %p56, %p57
    %s60 = sadd.s32 %s59, 1
    %p63 = scmp.eq.s32.totalorder %s11, 3
    %p64 = scmp.ne.s32.totalorder %s59, %s61
    %p65 = scmp.eq.s32.totalorder %s11, 0
    %p66 = por %p64, %p65
    %p67 = scmp.ne.s32.totalorder %s59, %s61
    %p68 = scmp.eq.s32.totalorder %s16, 3
    %p69 = por %p67, %p68
    %p70 = scmp.ne.s32.totalorder %s61, %s62
    %p71 = scmp.eq.s32.totalorder %s16, 0
    %p72 = por %p70, %p71
    %p73 = scmp.ne.s32.totalorder %s61, %s62
    %p74 = scmp.eq.s32.totalorder %s17, 3
    %p75 = por %p73, %p74
    %p77 = scmp.ne.s32.totalorder %s62, %s76
    %p78 = scmp.eq.s32.totalorder %s17, 0
    %p79 = por %p77, %p78
    %s81 = sadd.s32 %s80, 1
    %p84 = scmp.eq.s32.totalorder %s11, 3
    %p85 = scmp.ne.s32.totalorder %s80, %s82
    %p86 = scmp.eq.s32.totalorder %s11, 0
    %p87 = por %p85, %p86
    %p88 = scmp.ne.s32.totalorder %s80, %s82
    %p89 = scmp.eq.s32.totalorder %s16, 3
    %p90 = por %p88, %p89
    %p91 = scmp.ne.s32.totalorder %s82, %s83
    %p92 = scmp.eq.s32.totalorder %s16, 0
    %p93 = por %p91, %p92
    %p94 = scmp.ne.s32.totalorder %s82, %s83
    %p95 = scmp.eq.s32.totalorder %s17, 3
    %p96 = por %p94, %p95
    %p98 = scmp.ne.s32.totalorder %s83, %s97
    %p99 = scmp.eq.s32.totalorder %s17, 0
    %p100 = por %p98, %p99
    %s102 = sadd.s32 %s101, 1
    %p105 = scmp.eq.s32.totalorder %s11, 3
    %p106 = scmp.ne.s32.totalorder %s101, %s103
    %p107 = scmp.eq.s32.totalorder %s11, 0
    %p108 = por %p106, %p107
    %p109 = scmp.ne.s32.totalorder %s101, %s103
    %p110 = scmp.eq.s32.totalorder %s16, 3
    %p111 = por %p109, %p110
    %p112 = scmp.ne.s32.totalorder %s103, %s104
    %p113 = scmp.eq.s32.totalorder %s16, 0
    %p114 = por %p112, %p113
    %p115 = scmp.ne.s32.totalorder %s103, %s104
    %p116 = scmp.eq.s32.totalorder %s17, 3
    %p117 = por %p115, %p116
    %p119 = scmp.ne.s32.totalorder %s104, %s118
    %p120 = scmp.eq.s32.totalorder %s17, 0
    %p121 = por %p119, %p120
    %s123 = sadd.s32 %s122, 1
    %p126 = scmp.eq.s32.totalorder %s11, 3
    %p127 = scmp.ne.s32.totalorder %s122, %s124
    %p128 = scmp.eq.s32.totalorder %s11, 0
    %p129 = por %p127, %p128
    %p130 = scmp.ne.s32.totalorder %s122, %s124
    %p131 = scmp.eq.s32.totalorder %s16, 3
    %p132 = por %p130, %p131
    %p133 = scmp.ne.s32.totalorder %s124, %s125
    %p134 = scmp.eq.s32.totalorder %s16, 0
    %p135 = por %p133, %p134
    %p136 = scmp.ne.s32.totalorder %s124, %s125
    %p137 = scmp.eq.s32.totalorder %s17, 3
    %p138 = por %p136, %p137
    %p140 = scmp.ne.s32.totalorder %s125, %s139
    %p141 = scmp.eq.s32.totalorder %s17, 0
    %p142 = por %p140, %p141
    %s143 = ssub.s32 %s18, %s30
    %s144 = ssub.s32 %s19, %s26
    %s145 = sor.u32 %s143, %s144
    %p146 = scmp.eq.s32.totalorder %s145, 0
    %s148 = sadd.s32 %s147, 1
    %s149 = scalar_select %p146, %s147, %s148
    %p152 = pneg %p146
    %p153 = scmp.eq.s32.totalorder %s11, 3
    %p154 = por %p152, %p153
    %p155 = scmp.ne.s32.totalorder %s147, %s150
    %p156 = scmp.eq.s32.totalorder %s11, 0
    %p157 = por %p155, %p156
    %p158 = scmp.ne.s32.totalorder %s147, %s150
    %p159 = scmp.eq.s32.totalorder %s16, 3
    %p160 = por %p158, %p159
    %p161 = scmp.ne.s32.totalorder %s150, %s151
    %p162 = scmp.eq.s32.totalorder %s16, 0
    %p163 = por %p161, %p162
    %p164 = scmp.ne.s32.totalorder %s150, %s151
    %p165 = scmp.eq.s32.totalorder %s17, 3
    %p166 = por %p164, %p165
    %p168 = scmp.ne.s32.totalorder %s151, %s167
    %p169 = scmp.eq.s32.totalorder %s17, 0
    %p170 = por %p168, %p169
    %p171 = scmp.le.s32.totalorder 1, %s11
    %p172 = scmp.lt.s32.totalorder %s11, 5
    %p173 = pnand %p171, %p172
    %p174 = pneg %p173
    // Predicated region
    $region9: #{tpu_custom_call.1} parent=5 // pred_check
      _
    $region10: #{tpu_custom_call.1} parent=5 // pred_check_branch
      %176 = sbr.rel (%p173) target = $region12
    $region11: #{tpu_custom_call.1} parent=5 // pred_region
      %s177 = ssub.s32 %s11, 1
      // Predicated region
      $region13: #{tpu_custom_call.1} parent=11 // pred_check
        %p178 = pneg %p72
      $region14: #{tpu_custom_call.1} parent=11 // pred_check_branch
        %180 = sbr.rel (%p178) target = $region16
      $region15: #{tpu_custom_call.1} parent=11 // pred_region
        _
      $region16: #{tpu_custom_call.1} parent=11 // pred_fallthru
        _
      // Predicated region
      $region17: #{tpu_custom_call.1} parent=11 // pred_check
        %p181 = pneg %p93
      $region18: #{tpu_custom_call.1} parent=11 // pred_check_branch
        %183 = sbr.rel (%p181) target = $region20
      $region19: #{tpu_custom_call.1} parent=11 // pred_region
        _
      $region20: #{tpu_custom_call.1} parent=11 // pred_fallthru
        _
      // Predicated region
      $region21: #{tpu_custom_call.1} parent=11 // pred_check
        %p184 = pneg %p114
      $region22: #{tpu_custom_call.1} parent=11 // pred_check_branch
        %186 = sbr.rel (%p184) target = $region24
      $region23: #{tpu_custom_call.1} parent=11 // pred_region
        _
      $region24: #{tpu_custom_call.1} parent=11 // pred_fallthru
        _
      // Predicated region
      $region25: #{tpu_custom_call.1} parent=11 // pred_check
        %p187 = pneg %p135
      $region26: #{tpu_custom_call.1} parent=11 // pred_check_branch
        %189 = sbr.rel (%p187) target = $region28
      $region27: #{tpu_custom_call.1} parent=11 // pred_region
        _
      $region28: #{tpu_custom_call.1} parent=11 // pred_fallthru
        _
    $region12: #{tpu_custom_call.1} parent=5 // pred_fallthru
      _
    %p190 = scmp.lt.s32.totalorder %s11, 4
    // Predicated region
    $region29: #{tpu_custom_call.1} parent=5 // pred_check
      %p191 = pneg %p190
    $region30: #{tpu_custom_call.1} parent=5 // pred_check_branch
      %193 = sbr.rel (%p191) target = $region32
    $region31: #{tpu_custom_call.1} parent=5 // pred_region
      // Predicated region
      $region33: #{tpu_custom_call.1} parent=31 // pred_check
        %p194 = pneg %p45
      $region34: #{tpu_custom_call.1} parent=31 // pred_check_branch
        %196 = sbr.rel (%p194) target = $region36
      $region35: #{tpu_custom_call.1} parent=31 // pred_region
        %s197 = smul.u32 4, %s19
        %p198 = scmp.lt.s32.totalorder %s18, 1
        %s199 = scalar_select %p198, %s18, 1
        %p200 = scmp.lt.s32.totalorder %s197, 7
        %s201 = scalar_select %p200, %s197, 7
        %s202 = smul.addr %s199, 8
        %s203 = sadd.s32 %s201, %s202
        %s204 = smul.addr %s203, 4
        %s205 = scalar_lea.vmem %s0, %s204
        %s206 = smul.u32 4, %s19
      $region36: #{tpu_custom_call.1} parent=31 // pred_fallthru
        _
    $region32: #{tpu_custom_call.1} parent=5 // pred_fallthru
      _
    %p207 = scmp.le.s32.totalorder 1, %s11
    %p208 = scmp.lt.s32.totalorder %s11, 5
    %p209 = pnand %p207, %p208
    %p210 = pneg %p209
    // Predicated region
    $region37: #{tpu_custom_call.1} parent=5 // pred_check
      _
    $region38: #{tpu_custom_call.1} parent=5 // pred_check_branch
      %212 = sbr.rel (%p209) target = $region40
    $region39: #{tpu_custom_call.1} parent=5 // pred_region
      %s213 = ssub.s32 %s11, 1
      %s214 = smul.u32 4, %s21
      %p215 = scmp.lt.s32.totalorder %s20, 1
      %s216 = scalar_select %p215, %s20, 1
      %p217 = scmp.lt.s32.totalorder %s214, 7
      %s218 = scalar_select %p217, %s214, 7
      %s219 = smul.addr %s216, 8
      %s220 = sadd.s32 %s218, %s219
      %s221 = smul.addr %s220, 4
      %s222 = scalar_lea.vmem %s0, %s221
      %p223 = pneg %p51
      %p224 = pneg %p48
      %p225 = pneg %p72
      %p226 = pneg %p69
      %p227 = pneg %p93
      %p228 = pneg %p90
      %p229 = pneg %p114
      %p230 = pneg %p111
      %p231 = pneg %p135
      %p232 = pneg %p132
      %p233 = pneg %p163
      %p234 = pneg %p160
      %s235 = smul.u32 4, %s21
      %p236 = scmp.lt.s32.totalorder %s20, 1
      %s237 = scalar_select %p236, %s20, 1
      %p238 = scmp.lt.s32.totalorder %s235, 7
      %s239 = scalar_select %p238, %s235, 7
      %s240 = smul.addr %s237, 8
      %s241 = sadd.s32 %s239, %s240
      %s242 = smul.addr %s241, 4
      %s243 = scalar_lea.vmem %s5, %s242
      %s244 = smul.u32 4, %s21
      %p245 = scmp.lt.s32.totalorder %s20, 1
      %s246 = scalar_select %p245, %s20, 1
      %p247 = scmp.lt.s32.totalorder %s244, 7
      %s248 = scalar_select %p247, %s244, 7
      %s249 = smul.addr %s246, 8
      %s250 = sadd.s32 %s248, %s249
      %s251 = smul.addr %s250, 4
      %s252 = scalar_lea.vmem %s0, %s251
      %s253 = smul.u32 4, %s21
      %s254 = smul.u32 4, %s21
      %p255 = scmp.lt.s32.totalorder %s20, 1
      %s256 = scalar_select %p255, %s20, 1
      %p257 = scmp.lt.s32.totalorder %s254, 7
      %s258 = scalar_select %p257, %s254, 7
      %s259 = smul.addr %s256, 8
      %s260 = sadd.s32 %s258, %s259
      %s261 = smul.addr %s260, 4
      %s262 = scalar_lea.vmem %s5, %s261
      %s263 = smul.u32 4, %s21
      %v265 = vld [vmem:[%s252] sm:$0xf]
      %v266 = vld [vmem:[%s252 + $0x4] sm:$0xf]
      %v267 = vld [vmem:[%s252 + $0x8] sm:$0xf]
      %v268 = vld [vmem:[%s252 + $0xc] sm:$0xf]
      %v269 = vld [vmem:[%s1] sm:$0xf]
      %v270 = vld [vmem:[%s1 + $0x4] sm:$0xf]
      %v271 = vld [vmem:[%s1 + $0x8] sm:$0xf]
      %v272 = vld [vmem:[%s1 + $0xc] sm:$0xf]
      %v273 = vld [vmem:[%s1 + $0x10] sm:$0x3]
      %v274 = vld [vmem:[%s2] sm:$0x1]
      %v276 = vlaneseq
      %v277 = vshrl.u32 %v276, 7
      %v278 = vsub.s32 0, %v277
      %v279 = vrot.slane %v274, %v278
      %v285 = vunpack.c.l.b16 %v265
      %v286 = vunpack.c.l.b16 %v266
      %v287 = vunpack.c.l.b16 %v267
      %v288 = vunpack.c.l.b16 %v268
      %v289 = vpack.c.b16 %v286, %v285
      %v290 = vpack.c.b16 %v288, %v287
      %v296 = vunpack.c.l.b16 %v269
      %v297 = vunpack.c.l.b16 %v270
      %v298 = vunpack.c.l.b16 %v271
      %v299 = vunpack.c.l.b16 %v272
      %v300 = vunpack.c.l.b16 %v273
      %v301 = vpack.c.b16 %v297, %v296
      %v302 = vpack.c.b16 %v299, %v298
      %v303 = vpack.c.b16 %v300, %v300
      %vm306 = vcmask 293888
      %v308 = vsel %vm306, %v289, 0
      %v311 = vsel %vm306, %v290, 0
      %vm313 = vcmask 1041408
      %v315 = vsel %vm313, %v303, 0
      %317 = vmatprep.subr.bf16.mxu0 0
      %318 = vmatpush1.bf16.msra.mxu0 %v301
      %319 = vmatprep.subr.bf16.mxu0 0
      %320 = vmatpush1.bf16.msra.mxu0 %v302
      %321 = vmatprep.subr.bf16.mxu0 0
      %322 = vmatpush1.bf16.msra.mxu0 %v315
      %323 = vmatprep.subr.bf16.mxu0 0
      %324 = vmatpush1.bf16.msra.mxu0 0
      %325 = vmatprep.subr.bf16.mxu0 0
      %326 = vmatpush1.bf16.msra.mxu0 0
      %327 = vmatprep.subr.bf16.mxu0 0
      %328 = vmatpush1.bf16.msra.mxu0 0
      %329 = vmatprep.subr.bf16.mxu0 0
      %330 = vmatpush1.bf16.msra.mxu0 0
      %331 = vmatprep.subr.bf16.mxu0 0
      %332 = vmatpush1.bf16.msra.mxu0 0
      %333 = vmatprep.subr.bf16.mxu0 0
      %334 = vmatpush1.bf16.msra.mxu0 0
      %335 = vmatprep.subr.bf16.mxu0 0
      %336 = vmatpush1.bf16.msra.mxu0 0
      %337 = vmatprep.subr.bf16.mxu0 0
      %338 = vmatpush1.bf16.msra.mxu0 0
      %339 = vmatprep.subr.bf16.mxu0 0
      %340 = vmatpush1.bf16.msra.mxu0 0
      %341 = vmatprep.subr.bf16.mxu0 0
      %342 = vmatpush1.bf16.msra.mxu0 0
      %343 = vmatprep.subr.bf16.mxu0 0
      %344 = vmatpush1.bf16.msra.mxu0 0
      %345 = vmatprep.subr.bf16.mxu0 0
      %346 = vmatpush1.bf16.msra.mxu0 0
      %347 = vmatprep.subr.bf16.mxu0 0
      %348 = vmatpush1.bf16.msra.mxu0 0
      %349 = vmatprep.mubr.bf16.mxu0 0
      %350 = vmatmul.mubr.bf16.gmra.mrb[0].mxu0 %v308
      %v351 = vpop.f32.mrb[0].mxu0
      %v352 = vadd.f32 %v279, %v351
      %v353 = vpop.f32.mrb[0].mxu0
      %v354 = vpop.f32.mrb[0].mxu0
      %v355 = vadd.f32 %v279, %v354
      %v356 = vpop.f32.mrb[0].mxu0
      %357 = vmatprep.mubr.bf16.mxu0 0
      %358 = vmatmul.mubr.bf16.gmra.mrb[0].mxu0 %v311
      %v359 = vpop.f32.mrb[0].mxu0
      %v360 = vadd.f32 %v279, %v359
      %v361 = vpop.f32.mrb[0].mxu0
      %v362 = vpop.f32.mrb[0].mxu0
      %v363 = vadd.f32 %v279, %v362
      %v364 = vpop.f32.mrb[0].mxu0
      %365 = vdwg.mxu0
      %v366 = vmul.f32 %v352, 0.5
      %v367 = vmul.f32 %v355, 0.5
      %v368 = vmul.f32 %v360, 0.5
      %v369 = vmul.f32 %v363, 0.5
      %v370 = vmul.f32 %v352, 0.044715
      %v371 = vmul.f32 %v355, 0.044715
      %v372 = vmul.f32 %v360, 0.044715
      %v373 = vmul.f32 %v363, 0.044715
      %v374 = vmul.f32 %v370, %v352
      %v375 = vmul.f32 %v371, %v355
      %v376 = vmul.f32 %v372, %v360
      %v377 = vmul.f32 %v373, %v363
      %v378 = vmul.f32 %v374, %v352
      %v379 = vmul.f32 %v375, %v355
      %v380 = vmul.f32 %v376, %v360
      %v381 = vmul.f32 %v377, %v363
      %v382 = vadd.f32 %v352, %v378
      %v383 = vadd.f32 %v355, %v379
      %v384 = vadd.f32 %v360, %v380
      %v385 = vadd.f32 %v363, %v381
      %v386 = vmul.f32 %v382, 0.7978846
      %v387 = vmul.f32 %v383, 0.7978846
      %v388 = vmul.f32 %v384, 0.7978846
      %v389 = vmul.f32 %v385, 0.7978846
      %v390 = vtanh.pop %v386
      %v391 = vtanh.pop %v387
      %v392 = vtanh.pop %v388
      %v393 = vtanh.pop %v389
      %v394 = vadd.f32 %v390, 1.0
      %v395 = vadd.f32 %v391, 1.0
      %v396 = vadd.f32 %v392, 1.0
      %v397 = vadd.f32 %v393, 1.0
      %v398 = vmul.f32 %v366, %v394
      %v399 = vmul.f32 %v367, %v395
      %v400 = vmul.f32 %v368, %v396
      %v401 = vmul.f32 %v369, %v397
      %v402 = vld [vmem:[%s3] sm:$0x1]
      %v404 = vlaneseq
      %v405 = vshrl.u32 %v404, 7
      %v406 = vsub.s32 0, %v405
      %v407 = vrot.slane %v402, %v406
      %v409 = vmul.f32 %v398, %v407
      %v410 = vmul.f32 %v399, %v407
      %v411 = vmul.f32 %v400, %v407
      %v412 = vmul.f32 %v401, %v407
      %v413 = vld [vmem:[%s4] sm:$0x1]
      %v415 = vlaneseq
      %v416 = vshrl.u32 %v415, 7
      %v417 = vsub.s32 0, %v416
      %v418 = vrot.slane %v413, %v417
      %v420 = vadd.f32 %v409, %v418
      %v421 = vadd.f32 %v410, %v418
      %v422 = vadd.f32 %v411, %v418
      %v423 = vadd.f32 %v412, %v418
      %v424 = vpack.c.bf16 %v421, %v420
      %v425 = vpack.c.bf16 %v423, %v422
      %v428 = vunpack.c.l.b16 %v424
      %v429 = vunpack.c.h.b16 %v424
      %v430 = vunpack.c.l.b16 %v425
      %v431 = vunpack.c.h.b16 %v425
      %v432 = vpack.c.b16 %v428, %v428
      %v433 = vpack.c.b16 %v429, %v429
      %v434 = vpack.c.b16 %v430, %v430
      %v435 = vpack.c.b16 %v431, %v431
      %vm440 = vcmask 125952
      %441 = vst.msk [vmem:[%s262] sm:$0xf] %vm440, %v432
      %442 = vst.msk [vmem:[%s262 + $0x4] sm:$0xf] %vm440, %v433
      %443 = vst.msk [vmem:[%s262 + $0x8] sm:$0xf] %vm440, %v434
      %444 = vst.msk [vmem:[%s262 + $0xc] sm:$0xf] %vm440, %v435
      %s445 = smul.u32 4, %s21
      %p446 = scmp.lt.s32.totalorder %s20, 1
      %s447 = scalar_select %p446, %s20, 1
      %p448 = scmp.lt.s32.totalorder %s445, 7
      %s449 = scalar_select %p448, %s445, 7
      %s450 = smul.addr %s447, 8
      %s451 = sadd.s32 %s449, %s450
      %s452 = smul.addr %s451, 4
      %s453 = scalar_lea.vmem %s5, %s452
      // Predicated region
      $region41: #{tpu_custom_call.1} parent=39 // pred_check
        %p454 = pneg %p160
      $region42: #{tpu_custom_call.1} parent=39 // pred_check_branch
        %456 = sbr.rel (%p454) target = $region44
      $region43: #{tpu_custom_call.1} parent=39 // pred_region
        %s457 = smul.u32 4, %s21
      $region44: #{tpu_custom_call.1} parent=39 // pred_fallthru
        _
    $region40: #{tpu_custom_call.1} parent=5 // pred_fallthru
      _
    %p458 = scmp.le.s32.totalorder 2, %s11
    // Predicated region
    $region45: #{tpu_custom_call.1} parent=5 // pred_check
      %p459 = pneg %p458
    $region46: #{tpu_custom_call.1} parent=5 // pred_check_branch
      %461 = sbr.rel (%p459) target = $region48
    $region47: #{tpu_custom_call.1} parent=5 // pred_region
      %s462 = ssub.s32 %s11, 2
      // Predicated region
      $region49: #{tpu_custom_call.1} parent=47 // pred_check
        %p463 = pneg %p166
      $region50: #{tpu_custom_call.1} parent=47 // pred_check_branch
        %465 = sbr.rel (%p463) target = $region52
      $region51: #{tpu_custom_call.1} parent=47 // pred_region
        %s466 = smul.u32 4, %s23
        %p467 = scmp.lt.s32.totalorder %s22, 1
        %s468 = scalar_select %p467, %s22, 1
        %p469 = scmp.lt.s32.totalorder %s466, 7
        %s470 = scalar_select %p469, %s466, 7
        %s471 = smul.addr %s468, 8
        %s472 = sadd.s32 %s470, %s471
        %s473 = smul.addr %s472, 4
        %s474 = scalar_lea.vmem %s5, %s473
      $region52: #{tpu_custom_call.1} parent=47 // pred_fallthru
        _
    $region48: #{tpu_custom_call.1} parent=5 // pred_fallthru
      _
  $region6: #{tpu_custom_call.1} parent=0 // loop_footer
    %s15 = sadd.s32 1, %s11
  $region7: #{tpu_custom_call.1} parent=0 // loop_footer_branch
    %10 = sbr.rel target = $region3
  $region8: #{tpu_custom_call.1} parent=0 // loop_exit
    _

</llo_original>
